<compile_context>
chip_gen: v7x
topology: tpu7x:2x2x1
jax: 0.10.0
libtpu: 0.0.40
codegen_flags: <defaults>
</compile_context>

<pallas_src>
import jax
import jax.numpy as jnp
from jax.experimental import pallas as pl
from jax.experimental.pallas import tpu as pltpu


def interval_softmax_kernel(l_ref, u_ref, lo_ref, up_ref):
    # Keep all math in float32 (v5e VPU/EUP has no bf16 path); cast only at the store.
    l = l_ref[...].astype(jnp.float32)          # (TB, N)
    u = u_ref[...].astype(jnp.float32)          # (TB, N)

    # Per-row stabilizer over every value that can appear in any interval row.
    m = jnp.maximum(jnp.max(l, axis=-1, keepdims=True),
                    jnp.max(u, axis=-1, keepdims=True))        # (TB, 1)

    el = jnp.exp(l - m)                          # (TB, N)
    eu = jnp.exp(u - m)                          # (TB, N)
    s_l = jnp.sum(el, axis=-1, keepdims=True)    # (TB, 1)
    s_u = jnp.sum(eu, axis=-1, keepdims=True)    # (TB, 1)

    # lower[b,i] = softmax over {u_j (j!=i), l_i} evaluated at i.
    # s_u - eu_i >= 0 exactly (eu_i is one of the summands of s_u).
    lo_ref[...] = (el / (el + (s_u - eu))).astype(lo_ref.dtype)
    # upper[b,i] = softmax over {l_j (j!=i), u_i} evaluated at i.
    up_ref[...] = (eu / (eu + (s_l - el))).astype(up_ref.dtype)


def _choose_batch_tile(B):
    """Whole batch in one step for small B; otherwise a lane-/sublane-friendly divisor."""
    if B <= 512:
        return B
    for tb in range(512, 7, -8):
        if B % tb == 0:
            return tb
    return B  # fallback: single full-batch tile


def interval_softmax(l, u, *, tb=None):
    """l, u: (batch, n) lower / upper bounds. Returns (lower_result, upper_result)."""
    B, N = l.shape
    if tb is None:
        tb = _choose_batch_tile(B)
    assert B % tb == 0, "batch must be divisible by the batch tile"
    # block last dim == full N (ok regardless of 128-divisibility); tb == B or multiple of 8
    assert tb == B or tb % 8 == 0, "batch tile must be the full batch or a multiple of 8"

    spec = pl.BlockSpec((tb, N), lambda i: (i, 0))
    return pl.pallas_call(
        interval_softmax_kernel,
        out_shape=(jax.ShapeDtypeStruct((B, N), l.dtype),
                   jax.ShapeDtypeStruct((B, N), l.dtype)),
        grid=(B // tb,),
        in_specs=[spec, spec],
        out_specs=(spec, spec),
        compiler_params=pltpu.CompilerParams(dimension_semantics=("parallel",)),
    )(l, u)


def interval_softmax_ref(l, u):
    """Pure-JAX reference mirroring the torch N^2 construction, for correctness checking."""
    B, N = l.shape
    eye = jnp.eye(N, dtype=l.dtype)
    lower = jnp.repeat(u[:, None, :], N, axis=1)
    upper = jnp.repeat(l[:, None, :], N, axis=1)
    lower = lower - lower * eye + jnp.repeat(l[:, None, :], N, axis=1) * eye
    upper = upper - upper * eye + jnp.repeat(u[:, None, :], N, axis=1) * eye
    lower_sm = jax.nn.softmax(lower, axis=2)
    upper_sm = jax.nn.softmax(upper, axis=2)
    return jnp.sum(lower_sm * eye, axis=1), jnp.sum(upper_sm * eye, axis=1)


if __name__ == "__main__":
    # NOTE: Interval_Softmax.__init__ stores `layer` but the forward pass uses no
    # parameters, so there are no weights to initialize.
    key = jax.random.PRNGKey(0)
    k1, k2 = jax.random.split(key)
    B, N = 16, 10
    center = jax.random.normal(k1, (B, N), dtype=jnp.float32)
    eps = 0.1 * jnp.abs(jax.random.normal(k2, (B, N), dtype=jnp.float32))
    l = center - eps   # lower bounds
    u = center + eps   # upper bounds

    lower_result, upper_result = interval_softmax(l, u)
    jax.block_until_ready((lower_result, upper_result))

    lo_ref, up_ref = interval_softmax_ref(l, u)
    assert jnp.allclose(lower_result, lo_ref, atol=1e-6, rtol=1e-5)
    assert jnp.allclose(upper_result, up_ref, atol=1e-6, rtol=1e-5)
    # sanity: lower bound of the softmax output <= upper bound
    assert bool(jnp.all(lower_result <= upper_result + 1e-7))

    print("KERNEL_OK")
</pallas_src>

<mosaic_0001>
module attributes {stable_mosaic.version = 11 : i64} {
  func.func @interval_softmax_kernel(%arg0: i32, %arg1: memref<16x10xf32, #tpu.memory_space<vmem>>, %arg2: memref<16x10xf32, #tpu.memory_space<vmem>>, %arg3: memref<16x10xf32, #tpu.memory_space<vmem>>, %arg4: memref<16x10xf32, #tpu.memory_space<vmem>>) attributes {dimension_semantics = [#tpu.dimension_semantics<parallel>], iteration_bounds = array<i64: 1>, scalar_prefetch = 0 : i64, scratch_operands = 0 : i64, tpu.core_type = #tpu.core_type<tc>, window_params = [{transform_indices = @transform_0, window_bounds = array<i64: 16, 10>}, {transform_indices = @transform_1, window_bounds = array<i64: 16, 10>}, {transform_indices = @transform_2, window_bounds = array<i64: 16, 10>}, {transform_indices = @transform_3, window_bounds = array<i64: 16, 10>}]} {
    %c0 = arith.constant 0 : index
    %c0_0 = arith.constant 0 : index
    %0 = vector.load %arg1[%c0, %c0_0] : memref<16x10xf32, #tpu.memory_space<vmem>>, vector<16x10xf32>
    %c0_1 = arith.constant 0 : index
    %c0_2 = arith.constant 0 : index
    %1 = vector.load %arg2[%c0_1, %c0_2] : memref<16x10xf32, #tpu.memory_space<vmem>>, vector<16x10xf32>
    %cst = arith.constant dense<0xFF800000> : vector<16xf32>
    %2 = vector.multi_reduction <maximumf>, %0, %cst [1] : vector<16x10xf32> to vector<16xf32>
    %3 = vector.shape_cast %2 : vector<16xf32> to vector<16x1xf32>
    %cst_3 = arith.constant dense<0xFF800000> : vector<16xf32>
    %4 = vector.multi_reduction <maximumf>, %1, %cst_3 [1] : vector<16x10xf32> to vector<16xf32>
    %5 = vector.shape_cast %4 : vector<16xf32> to vector<16x1xf32>
    %6 = arith.maximumf %3, %5 : vector<16x1xf32>
    %7 = vector.broadcast %6 : vector<16x1xf32> to vector<16x10xf32>
    %8 = arith.subf %0, %7 : vector<16x10xf32>
    %9 = math.exp %8 : vector<16x10xf32>
    %10 = vector.broadcast %6 : vector<16x1xf32> to vector<16x10xf32>
    %11 = arith.subf %1, %10 : vector<16x10xf32>
    %12 = math.exp %11 : vector<16x10xf32>
    %cst_4 = arith.constant dense<0.000000e+00> : vector<16xf32>
    %13 = vector.multi_reduction <add>, %9, %cst_4 [1] : vector<16x10xf32> to vector<16xf32>
    %14 = vector.shape_cast %13 : vector<16xf32> to vector<16x1xf32>
    %cst_5 = arith.constant dense<0.000000e+00> : vector<16xf32>
    %15 = vector.multi_reduction <add>, %12, %cst_5 [1] : vector<16x10xf32> to vector<16xf32>
    %16 = vector.shape_cast %15 : vector<16xf32> to vector<16x1xf32>
    %17 = vector.broadcast %16 : vector<16x1xf32> to vector<16x10xf32>
    %18 = arith.subf %17, %12 : vector<16x10xf32>
    %19 = arith.addf %9, %18 : vector<16x10xf32>
    %20 = arith.divf %9, %19 : vector<16x10xf32>
    %c0_6 = arith.constant 0 : index
    %c0_7 = arith.constant 0 : index
    %21 = vector.load %arg3[%c0_6, %c0_7] : memref<16x10xf32, #tpu.memory_space<vmem>>, vector<16x10xf32>
    tpu.vector_store %arg3[%c0_6, %c0_7], %20 {strides = array<i32>} : memref<16x10xf32, #tpu.memory_space<vmem>>, vector<16x10xf32>,
    %22 = vector.broadcast %14 : vector<16x1xf32> to vector<16x10xf32>
    %23 = arith.subf %22, %9 : vector<16x10xf32>
    %24 = arith.addf %12, %23 : vector<16x10xf32>
    %25 = arith.divf %12, %24 : vector<16x10xf32>
    %c0_8 = arith.constant 0 : index
    %c0_9 = arith.constant 0 : index
    %26 = vector.load %arg4[%c0_8, %c0_9] : memref<16x10xf32, #tpu.memory_space<vmem>>, vector<16x10xf32>
    tpu.vector_store %arg4[%c0_8, %c0_9], %25 {strides = array<i32>} : memref<16x10xf32, #tpu.memory_space<vmem>>, vector<16x10xf32>,
    return
  }
  func.func @transform_0(%arg0: i32) -> (i32, i32) {
    %c0_i32 = arith.constant 0 : i32
    %c0_i32_0 = arith.constant 0 : i32
    return %arg0, %c0_i32 : i32, i32
  }
  func.func @transform_1(%arg0: i32) -> (i32, i32) {
    %c0_i32 = arith.constant 0 : i32
    %c0_i32_0 = arith.constant 0 : i32
    return %arg0, %c0_i32 : i32, i32
  }
  func.func @transform_2(%arg0: i32) -> (i32, i32) {
    %c0_i32 = arith.constant 0 : i32
    %c0_i32_0 = arith.constant 0 : i32
    return %arg0, %c0_i32 : i32, i32
  }
  func.func @transform_3(%arg0: i32) -> (i32, i32) {
    %c0_i32 = arith.constant 0 : i32
    %c0_i32_0 = arith.constant 0 : i32
    return %arg0, %c0_i32 : i32, i32
  }
}

</mosaic_0001>

<llo_original>
// kernel: tpu_custom_call.1
$region0: #{tpu_custom_call.1}
  #allocation0 [shape = 'u32[]', space=smem, size = 0x4, offset = 0x4, fixed_abs, tag = 'smem constant byte address 0x4 - core index']
  #allocation1 [shape = 'u32[144,128]{1,0:T(1,128)}', space=vmem, size = 0x12000, scoped, tag = 'internal scratch']
  %s0 = inlined_call_operand.hbm [shape: f32[16,10], index: 0, kind: input, shape index: {}]
  %s1 = inlined_call_operand.hbm [shape: f32[16,10], index: 1, kind: input, shape index: {}]
  %s2 = inlined_call_operand.hbm [shape: f32[16,10], index: 2, kind: output, shape index: {0}]
  %s3 = inlined_call_operand.hbm [shape: f32[16,10], index: 3, kind: output, shape index: {1}]
  %4 = xla_tuple %s2, %s3
  %s5 = sld [smem:[#allocation0]]
  $region34: #{tpu_custom_call.1} parent=0
    _
  %s7 = ssub.s32 1, %s5
  %s8 = scalar_select 0, %s7, %s5
  $region1: #{tpu_custom_call.1} parent=0
    #allocation2 [shape = 'u8[8192]{0}', space=vmem, size = 0x2000, scoped, tag = 'input window, operand 0, single buffered']
    #allocation3 [shape = 's32[1]{0}', space=sflag, size = 0x4, scoped, tag = 'scoped memory for tpu_custom_call.1']
    #allocation4 [shape = 's32[1]{0}', space=sflag, size = 0x4, scoped, tag = 'scoped memory for tpu_custom_call.1']
    #allocation5 [shape = 'u8[8192]{0}', space=vmem, size = 0x2000, scoped, tag = 'input window, operand 1, single buffered']
    #allocation6 [shape = 's32[1]{0}', space=sflag, size = 0x4, scoped, tag = 'scoped memory for tpu_custom_call.1']
    #allocation7 [shape = 'u8[8192]{0}', space=vmem, size = 0x2000, scoped, tag = 'output window, operand 0, single buffered']
    #allocation8 [shape = 'u8[8192]{0}', space=vmem, size = 0x2000, scoped, tag = 'output window, operand 1, single buffered']
    #allocation9 [shape = 's32[1]{0}', space=sflag, size = 0x4, scoped, tag = 'scoped memory for tpu_custom_call.1']
    %9 = vsyncpa [#allocation3], 0
    %10 = vsyncpa [#allocation6], 0
    %11 = vsyncpa [#allocation4], 0
    %12 = vsyncpa [#allocation9], 0
    // Predicated region
    $region2: #{tpu_custom_call.1} parent=1 // pred_check
      _
    $region3: #{tpu_custom_call.1} parent=1 // pred_check_branch
      %14 = sbr.rel (0) target = $region5
    $region4: #{tpu_custom_call.1} parent=1 // pred_region
      %s16 = ssub.s32 256, 256
      %17 = vsyncadd [#allocation3], %s16
      %s18 = sshll.u32 [#allocation2], 4
      %s19 = int_to_ptr.vmem [resolvable:$true] %s18
      %24 = dma.hbm_to_vmem [thread:$0]  %s0, 256, %s19, [#allocation3], 128, 128, 8
    $region5: #{tpu_custom_call.1} parent=1 // pred_fallthru
      _
    // Predicated region
    $region6: #{tpu_custom_call.1} parent=1 // pred_check
      _
    $region7: #{tpu_custom_call.1} parent=1 // pred_check_branch
      %26 = sbr.rel (0) target = $region9
    $region8: #{tpu_custom_call.1} parent=1 // pred_region
      %s28 = ssub.s32 256, 256
      %29 = vsyncadd [#allocation6], %s28
      %s30 = sshll.u32 [#allocation5], 4
      %s31 = int_to_ptr.vmem [resolvable:$true] %s30
      %36 = dma.hbm_to_vmem [thread:$0]  %s1, 256, %s31, [#allocation6], 128, 128, 8
    $region9: #{tpu_custom_call.1} parent=1 // pred_fallthru
      _
    // Predicated region
    $region10: #{tpu_custom_call.1} parent=1 // pred_check
      _
    $region11: #{tpu_custom_call.1} parent=1 // pred_check_branch
      %38 = sbr.rel (0) target = $region13
    $region12: #{tpu_custom_call.1} parent=1 // pred_region
      %39 = dma.done [#allocation3], 256
    $region13: #{tpu_custom_call.1} parent=1 // pred_fallthru
      _
    // Predicated region
    $region14: #{tpu_custom_call.1} parent=1 // pred_check
      _
    $region15: #{tpu_custom_call.1} parent=1 // pred_check_branch
      %41 = sbr.rel (0) target = $region17
    $region16: #{tpu_custom_call.1} parent=1 // pred_region
      %42 = dma.done [#allocation6], 256
    $region17: #{tpu_custom_call.1} parent=1 // pred_fallthru
      _
    %v43 = vld [vmem:[#allocation2] sm:$0xff]
    %v44 = vld [vmem:[#allocation2 + $0x8] sm:$0xff]
    %v45 = vld [vmem:[#allocation5] sm:$0xff]
    %v46 = vld [vmem:[#allocation5 + $0x8] sm:$0xff]
    %vm47 = vcmask 80896
    %v48 = vsel %vm47, %v43, -inf
    %49 = vmax.xlane.f32.xlu0 %v48
    %v50 = vpop.xlane.xlu0 %49
    %v51 = vsel %vm47, %v44, -inf
    %52 = vmax.xlane.f32.xlu0 %v51
    %v53 = vpop.xlane.xlu0 %52
    %v54 = vsel %vm47, %v45, -inf
    %55 = vmax.xlane.f32.xlu0 %v54
    %v56 = vpop.xlane.xlu0 %55
    %v57 = vsel %vm47, %v46, -inf
    %58 = vmax.xlane.f32.xlu0 %v57
    %v59 = vpop.xlane.xlu0 %58
    %v60 = vmax.f32 %v50, %v56
    %v61 = vmax.f32 %v53, %v59
    %v62 = vsub.f32 %v43, %v60
    %v63 = vsub.f32 %v44, %v61
    %v64 = vmul.f32 %v62, 1.442695
    %v65 = vpow.pop %v64
    %v66 = vmul.f32 %v63, 1.442695
    %v67 = vpow.pop %v66
    %v68 = vsub.f32 %v45, %v60
    %v69 = vsub.f32 %v46, %v61
    %v70 = vmul.f32 %v68, 1.442695
    %v71 = vpow.pop %v70
    %v72 = vmul.f32 %v69, 1.442695
    %v73 = vpow.pop %v72
    %v74 = vsel %vm47, %v65, 0.0
    %75 = vadd.xlane.f32.xlu0 %v74
    %v76 = vpop.xlane.xlu0 %75
    %v77 = vsel %vm47, %v67, 0.0
    %78 = vadd.xlane.f32.xlu0 %v77
    %v79 = vpop.xlane.xlu0 %78
    %v80 = vsel %vm47, %v71, 0.0
    %81 = vadd.xlane.f32.xlu0 %v80
    %v82 = vpop.xlane.xlu0 %81
    %v83 = vsel %vm47, %v73, 0.0
    %84 = vadd.xlane.f32.xlu0 %v83
    %v85 = vpop.xlane.xlu0 %84
    %v86 = vsub.f32 %v82, %v71
    %v87 = vsub.f32 %v85, %v73
    %v88 = vadd.f32 %v65, %v86
    %v89 = vadd.f32 %v67, %v87
    %v90 = vrcp.pop %v88
    %v91 = vmul.f32 %v65, %v90
    %v92 = vrcp.pop %v89
    %v93 = vmul.f32 %v67, %v92
    %94 = vst.msk [vmem:[#allocation7] sm:$0xff] %vm47, %v91
    %95 = vst.msk [vmem:[#allocation7 + $0x8] sm:$0xff] %vm47, %v93
    %v96 = vsub.f32 %v76, %v65
    %v97 = vsub.f32 %v79, %v67
    %v98 = vadd.f32 %v71, %v96
    %v99 = vadd.f32 %v73, %v97
    %v100 = vrcp.pop %v98
    %v101 = vmul.f32 %v71, %v100
    %v102 = vrcp.pop %v99
    %v103 = vmul.f32 %v73, %v102
    %104 = vst.msk [vmem:[#allocation8] sm:$0xff] %vm47, %v101
    %105 = vst.msk [vmem:[#allocation8 + $0x8] sm:$0xff] %vm47, %v103
    // Predicated region
    $region18: #{tpu_custom_call.1} parent=1 // pred_check
      _
    $region19: #{tpu_custom_call.1} parent=1 // pred_check_branch
      %107 = sbr.rel (0) target = $region21
    $region20: #{tpu_custom_call.1} parent=1 // pred_region
      %s109 = ssub.s32 256, 256
      %110 = vsyncadd [#allocation4], %s109
      %s111 = sshll.u32 [#allocation7], 4
      %s112 = int_to_ptr.vmem [resolvable:$true] %s111
      %117 = dma.vmem_to_hbm [thread:$0]  %s112, 256, %s2, [#allocation4], 128, 128, 8
    $region21: #{tpu_custom_call.1} parent=1 // pred_fallthru
      _
    // Predicated region
    $region22: #{tpu_custom_call.1} parent=1 // pred_check
      _
    $region23: #{tpu_custom_call.1} parent=1 // pred_check_branch
      %119 = sbr.rel (0) target = $region25
    $region24: #{tpu_custom_call.1} parent=1 // pred_region
      %s121 = ssub.s32 256, 256
      %122 = vsyncadd [#allocation9], %s121
      %s123 = sshll.u32 [#allocation8], 4
      %s124 = int_to_ptr.vmem [resolvable:$true] %s123
      %129 = dma.vmem_to_hbm [thread:$0]  %s124, 256, %s3, [#allocation9], 128, 128, 8
    $region25: #{tpu_custom_call.1} parent=1 // pred_fallthru
      _
    // Predicated region
    $region26: #{tpu_custom_call.1} parent=1 // pred_check
      _
    $region27: #{tpu_custom_call.1} parent=1 // pred_check_branch
      %131 = sbr.rel (0) target = $region29
    $region28: #{tpu_custom_call.1} parent=1 // pred_region
      %132 = dma.done [#allocation4], 256
    $region29: #{tpu_custom_call.1} parent=1 // pred_fallthru
      _
    // Predicated region
    $region30: #{tpu_custom_call.1} parent=1 // pred_check
      _
    $region31: #{tpu_custom_call.1} parent=1 // pred_check_branch
      %134 = sbr.rel (0) target = $region33
    $region32: #{tpu_custom_call.1} parent=1 // pred_region
      %135 = dma.done [#allocation9], 256
    $region33: #{tpu_custom_call.1} parent=1 // pred_fallthru
      _
    %136 = vsyncpa [#allocation3], 1
    %137 = vsyncpa [#allocation6], 1
    %138 = vsyncpa [#allocation4], 1
    %139 = vsyncpa [#allocation9], 1

</llo_original>
